<compile_context>
chip_gen: v6e
topology: v6e:2x2x1
jax: 0.10.0
libtpu: 0.0.40
codegen_flags: <defaults>
</compile_context>

<pallas_src>
import jax
import jax.numpy as jnp
import numpy as np
from jax.experimental import pallas as pl
from jax.experimental.pallas import tpu as pltpu

B, D, H = 8, 32, 32  # batch, feature dim, hidden dim (small synthetic sizes)

_MAX_TILE_ROWS = 8192     # ~14 MiB double-buffered VMEM -> fits v5e/v6e/v7x
_SPLIT_THRESHOLD = 1024   # batches this big get >=2 grid steps (v7x megacore)


def _round_up(n, m):
    return ((n + m - 1) // m) * m


def _cdiv(a, b):
    return -(-a // b)


def _cscr_kernel(
    x_ref,                     # (tb, D) f32
    w_sel_ref, b_sel_ref,      # (D, 2D), (1, 2D)   = (1/tau)*[wc | wp], (1/tau)*[bc | bp]
    w_trunk_ref, b_trunk_ref,  # (2D, 2H), (1, 2H)  = [[wy_c,0],[wy_p,wa]], [by | ba]
    w_heads_ref, b_heads_ref,  # (2H, 4), (1, 4)    = [[wt,wctl,0,0],[0,0,ws,wh]], [bt,bctl,bs,bh]
    gates_ref,                 # (tb, 4D) bf16 out: [xc | xp | mc | mp]  (lane-dense, 128 when D=32)
    heads_ref,                 # (tb, 4)  f32 out:  [y_treat, y_ctl, a_s, a_h]
):
    x = x_ref[...]

    # --- fused selectors: one (D,2D) matmul (1/tau pre-folded into weights)
    logits = jnp.dot(x, w_sel_ref[...], preferred_element_type=jnp.float32) + b_sel_ref[...]
    m = jax.nn.sigmoid(logits)                       # (tb, 2D) = [mc | mp]
    x_sel = jnp.concatenate([x, x], axis=-1) * m     # (tb, 2D) = [xc | xp]

    # --- fused shared trunk: hy = relu(xc@wy_c + xp@wy_p + by), ha = relu(xp@wa + ba)
    h = jnp.dot(x_sel, w_trunk_ref[...], preferred_element_type=jnp.float32) + b_trunk_ref[...]
    h = jnp.maximum(h, 0.0)                          # (tb, 2H) = [hy | ha]

    # --- fused block-diagonal heads: [y_treat, y_ctl, a_s_logit, a_h_logit]
    heads = jnp.dot(h, w_heads_ref[...], preferred_element_type=jnp.float32) + b_heads_ref[...]

    # --- direct sub-slice stores (no output concatenation temporaries) --------
    d2 = x_sel.shape[-1]
    gates_ref[:, :d2] = x_sel.astype(jnp.bfloat16)
    gates_ref[:, d2:] = m.astype(jnp.bfloat16)

    # sigmoid only on the propensity columns; one full-block store.
    col = jax.lax.broadcasted_iota(jnp.int32, heads.shape, 1)
    heads_ref[...] = jnp.where(col < 2, heads, jax.nn.sigmoid(heads))


class CSCR:
    """JAX/Pallas re-implementation of the composite CSCR forward pass."""

    def __init__(self, key, d=D, h=H):
        self.d, self.h = d, h
        ks = jax.random.split(key, 9)

        def w(k, shape, fan_in):
            return jax.random.normal(k, shape, jnp.float32) / jnp.sqrt(float(fan_in))

        wc = w(ks[0], (d, d), d)
        wp = w(ks[1], (d, d), d)
        wy_c = w(ks[2], (d, h), d)
        wy_p = w(ks[3], (d, h), d)
        wt = w(ks[4], (h, 1), h)
        wctl = w(ks[5], (h, 1), h)
        wa = w(ks[6], (d, h), d)
        ws = w(ks[7], (h, 1), h)
        wh = w(ks[8], (h, 1), h)
        bc = jnp.zeros((1, d), jnp.float32)
        bp = jnp.zeros((1, d), jnp.float32)
        by = jnp.zeros((1, h), jnp.float32)
        ba = jnp.zeros((1, h), jnp.float32)
        bt = jnp.zeros((1, 1), jnp.float32)
        bctl = jnp.zeros((1, 1), jnp.float32)
        bs = jnp.zeros((1, 1), jnp.float32)
        bh = jnp.zeros((1, 1), jnp.float32)

        zdh = jnp.zeros((d, h), jnp.float32)
        zh1 = jnp.zeros((h, 1), jnp.float32)

        # Host-side packed parameters (column order must match in-kernel splits).
        self.w_sel = jnp.concatenate([wc, wp], axis=1)               # (d, 2d)
        self.b_sel = jnp.concatenate([bc, bp], axis=1)               # (1, 2d)
        self.w_trunk = jnp.concatenate(
            [jnp.concatenate([wy_c, zdh], axis=1),
             jnp.concatenate([wy_p, wa], axis=1)], axis=0)           # (2d, 2h)
        self.b_trunk = jnp.concatenate([by, ba], axis=1)             # (1, 2h)
        self.w_heads = jnp.concatenate(
            [jnp.concatenate([wt, wctl, zh1, zh1], axis=1),
             jnp.concatenate([zh1, zh1, ws, wh], axis=1)], axis=0)   # (2h, 4)
        self.b_heads = jnp.concatenate([bt, bctl, bs, bh], axis=1)   # (1, 4)

    def __call__(self, x, a, epoch):
        b, d = x.shape
        assert d == self.d

        # Epoch-annealed selector temperature folded into the selector weights
        # (kills the SMEM scalar input and the in-kernel logits*inv_tau multiply).
        tau = jnp.maximum(1.0, 5.0 * jnp.exp(-0.1 * jnp.asarray(epoch, jnp.float32)))
        inv_tau = (1.0 / tau).astype(jnp.float32)
        w_sel_eff = self.w_sel * inv_tau
        b_sel_eff = self.b_sel * inv_tau

        # Batch tiling: pad only to a multiple of 8, then pick a tile that
        # exactly tiles the padded batch (over-pad bounded by 8*(n_steps-1)).
        b_pad8 = _round_up(b, 8)
        n_steps = _cdiv(b_pad8, _MAX_TILE_ROWS)
        if b_pad8 >= _SPLIT_THRESHOLD:
            n_steps = max(n_steps, 2)          # keep both v7x TensorCores busy
        if n_steps > 1:
            n_steps = _round_up(n_steps, 2)    # even step count shards evenly
        tile_b = _round_up(_cdiv(b_pad8, n_steps), 8)
        b_pad = tile_b * n_steps
        x_in = x if b_pad == b else jnp.pad(x, ((0, b_pad - b), (0, 0)))

        def row(width):        # batch-blocked arrays
            return pl.BlockSpec((tile_b, width), lambda i: (i, 0))

        def rep(arr):          # weights replicated across the batch grid
            return pl.BlockSpec(arr.shape, lambda i: (0, 0))

        out_shapes = (
            jax.ShapeDtypeStruct((b_pad, 4 * d), jnp.bfloat16),  # [xc|xp|mc|mp]
            jax.ShapeDtypeStruct((b_pad, 4), jnp.float32),       # [y_t, y_c, a_s, a_h]
        )

        fn = pl.pallas_call(
            _cscr_kernel,
            out_shape=out_shapes,
            grid=(n_steps,),
            in_specs=[
                row(d),
                rep(w_sel_eff), rep(b_sel_eff),
                rep(self.w_trunk), rep(self.b_trunk),
                rep(self.w_heads), rep(self.b_heads),
            ],
            out_specs=(row(4 * d), row(4)),
            compiler_params=pltpu.CompilerParams(
                dimension_semantics=("parallel",),        # megacore sharding on v7x
                vmem_limit_bytes=32 * 1024 * 1024,        # safe on all generations
            ),
        )
        gates, heads = fn(
            x_in, w_sel_eff, b_sel_eff,
            self.w_trunk, self.b_trunk,
            self.w_heads, self.b_heads,
        )

        # Wrapper-side split of the lane-dense slabs (pure slicing).
        gates = gates[:b].astype(jnp.float32)
        heads = heads[:b]
        xc = gates[:, 0 * d:1 * d]
        xp = gates[:, 1 * d:2 * d]
        mc = gates[:, 2 * d:3 * d]
        mp = gates[:, 3 * d:4 * d]
        y_treat = heads[:, 0:1]
        y_ctl = heads[:, 1:2]
        a_s = heads[:, 2:3]
        a_h = heads[:, 3:4]
        # Tiny (B,1) elementwise mixing done in the wrapper: keeps the narrow
        # 1-lane `a` input and an extra output column out of the kernel.
        y_obs = a * y_treat + (1.0 - a) * y_ctl
        return y_obs, y_treat, y_ctl, a_s, a_h, xc, xp, mc, mp

    # Pure-JAX reference using the same packed weights (for validation).
    def reference(self, x, a, epoch):
        tau = jnp.maximum(1.0, 5.0 * jnp.exp(-0.1 * jnp.asarray(epoch, jnp.float32)))
        inv_tau = 1.0 / tau
        d = self.d
        m = jax.nn.sigmoid((x @ self.w_sel + self.b_sel) * inv_tau)
        x_sel = jnp.concatenate([x, x], axis=-1) * m
        h = jnp.maximum(x_sel @ self.w_trunk + self.b_trunk, 0.0)
        heads = h @ self.w_heads + self.b_heads
        y_treat, y_ctl = heads[:, 0:1], heads[:, 1:2]
        y_obs = a * y_treat + (1.0 - a) * y_ctl
        a_s = jax.nn.sigmoid(heads[:, 2:3])
        a_h = jax.nn.sigmoid(heads[:, 3:4])
        return (y_obs, y_treat, y_ctl, a_s, a_h,
                x_sel[:, :d], x_sel[:, d:], m[:, :d], m[:, d:])


if __name__ == "__main__":
    key = jax.random.PRNGKey(0)
    kx, ka, kw = jax.random.split(key, 3)

    x = jax.random.normal(kx, (B, D), jnp.float32)
    a = (jax.random.uniform(ka, (B, 1)) > 0.5).astype(jnp.float32)  # binary treatment
    epoch = 3

    model = CSCR(kw)
    outs = model(x, a, epoch)
    jax.block_until_ready(outs)

    (y_obs, y_treat, y_ctl, a_s, a_h, xc, xp, mc, mp) = outs
    assert y_obs.shape == (B, 1) and a_s.shape == (B, 1)
    assert xc.shape == (B, D) and mp.shape == (B, D)
    assert all(bool(jnp.all(jnp.isfinite(o))) for o in outs)

    refs = model.reference(x, a, epoch)
    for got, want in zip(outs, refs):
        np.testing.assert_allclose(np.asarray(got), np.asarray(want),
                                   rtol=1e-2, atol=1e-2)

    print("KERNEL_OK")
</pallas_src>

<mosaic_0001>
module attributes {stable_mosaic.version = 11 : i64} {
  func.func @_cscr_kernel(%arg0: i32, %arg1: memref<8x32xf32, #tpu.memory_space<vmem>>, %arg2: memref<32x64xf32, #tpu.memory_space<vmem>>, %arg3: memref<1x64xf32, #tpu.memory_space<vmem>>, %arg4: memref<64x64xf32, #tpu.memory_space<vmem>>, %arg5: memref<1x64xf32, #tpu.memory_space<vmem>>, %arg6: memref<64x4xf32, #tpu.memory_space<vmem>>, %arg7: memref<1x4xf32, #tpu.memory_space<vmem>>, %arg8: memref<8x128xbf16, #tpu.memory_space<vmem>>, %arg9: memref<8x4xf32, #tpu.memory_space<vmem>>) attributes {dimension_semantics = [#tpu.dimension_semantics<parallel>], iteration_bounds = array<i64: 1>, scalar_prefetch = 0 : i64, scratch_operands = 0 : i64, tpu.core_type = #tpu.core_type<tc>, window_params = [{transform_indices = @transform_0, window_bounds = array<i64: 8, 32>}, {pipeline_mode = #tpu.pipeline_mode<synchronous>, transform_indices = @transform_1, window_bounds = array<i64: 32, 64>}, {pipeline_mode = #tpu.pipeline_mode<synchronous>, transform_indices = @transform_2, window_bounds = array<i64: 1, 64>}, {pipeline_mode = #tpu.pipeline_mode<synchronous>, transform_indices = @transform_3, window_bounds = array<i64: 64, 64>}, {pipeline_mode = #tpu.pipeline_mode<synchronous>, transform_indices = @transform_4, window_bounds = array<i64: 1, 64>}, {pipeline_mode = #tpu.pipeline_mode<synchronous>, transform_indices = @transform_5, window_bounds = array<i64: 64, 4>}, {pipeline_mode = #tpu.pipeline_mode<synchronous>, transform_indices = @transform_6, window_bounds = array<i64: 1, 4>}, {transform_indices = @transform_7, window_bounds = array<i64: 8, 128>}, {transform_indices = @transform_8, window_bounds = array<i64: 8, 4>}]} {
    %c0 = arith.constant 0 : index
    %c0_0 = arith.constant 0 : index
    %0 = vector.load %arg1[%c0, %c0_0] : memref<8x32xf32, #tpu.memory_space<vmem>>, vector<8x32xf32>
    %c0_1 = arith.constant 0 : index
    %c0_2 = arith.constant 0 : index
    %1 = vector.load %arg2[%c0_1, %c0_2] : memref<32x64xf32, #tpu.memory_space<vmem>>, vector<32x64xf32>
    %cst = arith.constant dense<0.000000e+00> : vector<8x64xf32>
    %2 = tpu.matmul %0, %1, %cst {dimension_numbers = #tpu.dot_dimension_numbers<[1], [0], [0], [1], [0, 0, 1, 1], [], []>} : vector<8x32xf32>, vector<32x64xf32>, vector<8x64xf32> -> vector<8x64xf32>
    %c0_3 = arith.constant 0 : index
    %c0_4 = arith.constant 0 : index
    %3 = vector.load %arg3[%c0_3, %c0_4] : memref<1x64xf32, #tpu.memory_space<vmem>>, vector<1x64xf32>
    %4 = vector.broadcast %3 : vector<1x64xf32> to vector<8x64xf32>
    %5 = arith.addf %2, %4 : vector<8x64xf32>
    %6 = arith.negf %5 : vector<8x64xf32>
    %7 = math.exp %6 : vector<8x64xf32>
    %cst_5 = arith.constant 1.000000e+00 : f32
    %8 = vector.broadcast %cst_5 : f32 to vector<8x64xf32>
    %9 = arith.addf %8, %7 : vector<8x64xf32>
    %10 = arith.divf %8, %9 : vector<8x64xf32>
    %11 = tpu.concatenate %0, %0 in 1 : vector<8x32xf32>, vector<8x32xf32> -> vector<8x64xf32>
    %12 = arith.mulf %11, %10 : vector<8x64xf32>
    %c0_6 = arith.constant 0 : index
    %c0_7 = arith.constant 0 : index
    %13 = vector.load %arg4[%c0_6, %c0_7] : memref<64x64xf32, #tpu.memory_space<vmem>>, vector<64x64xf32>
    %cst_8 = arith.constant dense<0.000000e+00> : vector<8x64xf32>
    %14 = tpu.matmul %12, %13, %cst_8 {dimension_numbers = #tpu.dot_dimension_numbers<[1], [0], [0], [1], [0, 0, 1, 1], [], []>} : vector<8x64xf32>, vector<64x64xf32>, vector<8x64xf32> -> vector<8x64xf32>
    %c0_9 = arith.constant 0 : index
    %c0_10 = arith.constant 0 : index
    %15 = vector.load %arg5[%c0_9, %c0_10] : memref<1x64xf32, #tpu.memory_space<vmem>>, vector<1x64xf32>
    %16 = vector.broadcast %15 : vector<1x64xf32> to vector<8x64xf32>
    %17 = arith.addf %14, %16 : vector<8x64xf32>
    %cst_11 = arith.constant 0.000000e+00 : f32
    %18 = vector.broadcast %cst_11 : f32 to vector<8x64xf32>
    %19 = arith.maximumf %17, %18 : vector<8x64xf32>
    %c0_12 = arith.constant 0 : index
    %c0_13 = arith.constant 0 : index
    %20 = vector.load %arg6[%c0_12, %c0_13] : memref<64x4xf32, #tpu.memory_space<vmem>>, vector<64x4xf32>
    %cst_14 = arith.constant dense<0.000000e+00> : vector<8x4xf32>
    %21 = tpu.matmul %19, %20, %cst_14 {dimension_numbers = #tpu.dot_dimension_numbers<[1], [0], [0], [1], [0, 0, 1, 1], [], []>} : vector<8x64xf32>, vector<64x4xf32>, vector<8x4xf32> -> vector<8x4xf32>
    %c0_15 = arith.constant 0 : index
    %c0_16 = arith.constant 0 : index
    %22 = vector.load %arg7[%c0_15, %c0_16] : memref<1x4xf32, #tpu.memory_space<vmem>>, vector<1x4xf32>
    %23 = vector.broadcast %22 : vector<1x4xf32> to vector<8x4xf32>
    %24 = arith.addf %21, %23 : vector<8x4xf32>
    %25 = arith.truncf %12 : vector<8x64xf32> to vector<8x64xbf16>
    %c0_17 = arith.constant 0 : index
    %c0_18 = arith.constant 0 : index
    %26 = vector.load %arg8[%c0_17, %c0_18] : memref<8x128xbf16, #tpu.memory_space<vmem>>, vector<8x64xbf16>
    tpu.vector_store %arg8[%c0_17, %c0_18], %25 {strides = array<i32>} : memref<8x128xbf16, #tpu.memory_space<vmem>>, vector<8x64xbf16>,
    %27 = arith.truncf %10 : vector<8x64xf32> to vector<8x64xbf16>
    %c0_19 = arith.constant 0 : index
    %c64 = arith.constant 64 : index
    %28 = vector.load %arg8[%c0_19, %c64] : memref<8x128xbf16, #tpu.memory_space<vmem>>, vector<8x64xbf16>
    tpu.vector_store %arg8[%c0_19, %c64], %27 {strides = array<i32>} : memref<8x128xbf16, #tpu.memory_space<vmem>>, vector<8x64xbf16>,
    %29 = tpu.iota {dimensions = array<i32: 1>} : vector<8x4xi32>
    %c2_i32 = arith.constant 2 : i32
    %30 = vector.broadcast %c2_i32 : i32 to vector<8x4xi32>
    %31 = arith.cmpi slt, %29, %30 : vector<8x4xi32>
    %32 = arith.negf %24 : vector<8x4xf32>
    %33 = math.exp %32 : vector<8x4xf32>
    %cst_20 = arith.constant 1.000000e+00 : f32
    %34 = vector.broadcast %cst_20 : f32 to vector<8x4xf32>
    %35 = arith.addf %34, %33 : vector<8x4xf32>
    %36 = arith.divf %34, %35 : vector<8x4xf32>
    %37 = arith.select %31, %24, %36 : vector<8x4xi1>, vector<8x4xf32>
    %c0_21 = arith.constant 0 : index
    %c0_22 = arith.constant 0 : index
    %38 = vector.load %arg9[%c0_21, %c0_22] : memref<8x4xf32, #tpu.memory_space<vmem>>, vector<8x4xf32>
    tpu.vector_store %arg9[%c0_21, %c0_22], %37 {strides = array<i32>} : memref<8x4xf32, #tpu.memory_space<vmem>>, vector<8x4xf32>,
    return
  }
  func.func @transform_0(%arg0: i32) -> (i32, i32) {
    %c0_i32 = arith.constant 0 : i32
    %c0_i32_0 = arith.constant 0 : i32
    return %arg0, %c0_i32 : i32, i32
  }
  func.func @transform_1(%arg0: i32) -> (i32, i32) {
    %c0_i32 = arith.constant 0 : i32
    %c0_i32_0 = arith.constant 0 : i32
    %c0_i32_1 = arith.constant 0 : i32
    return %c0_i32, %c0_i32_0 : i32, i32
  }
  func.func @transform_2(%arg0: i32) -> (i32, i32) {
    %c0_i32 = arith.constant 0 : i32
    %c0_i32_0 = arith.constant 0 : i32
    %c0_i32_1 = arith.constant 0 : i32
    return %c0_i32, %c0_i32_0 : i32, i32
  }
  func.func @transform_3(%arg0: i32) -> (i32, i32) {
    %c0_i32 = arith.constant 0 : i32
    %c0_i32_0 = arith.constant 0 : i32
    %c0_i32_1 = arith.constant 0 : i32
    return %c0_i32, %c0_i32_0 : i32, i32
  }
  func.func @transform_4(%arg0: i32) -> (i32, i32) {
    %c0_i32 = arith.constant 0 : i32
    %c0_i32_0 = arith.constant 0 : i32
    %c0_i32_1 = arith.constant 0 : i32
    return %c0_i32, %c0_i32_0 : i32, i32
  }
  func.func @transform_5(%arg0: i32) -> (i32, i32) {
    %c0_i32 = arith.constant 0 : i32
    %c0_i32_0 = arith.constant 0 : i32
    %c0_i32_1 = arith.constant 0 : i32
    return %c0_i32, %c0_i32_0 : i32, i32
  }
  func.func @transform_6(%arg0: i32) -> (i32, i32) {
    %c0_i32 = arith.constant 0 : i32
    %c0_i32_0 = arith.constant 0 : i32
    %c0_i32_1 = arith.constant 0 : i32
    return %c0_i32, %c0_i32_0 : i32, i32
  }
  func.func @transform_7(%arg0: i32) -> (i32, i32) {
    %c0_i32 = arith.constant 0 : i32
    %c0_i32_0 = arith.constant 0 : i32
    return %arg0, %c0_i32 : i32, i32
  }
  func.func @transform_8(%arg0: i32) -> (i32, i32) {
    %c0_i32 = arith.constant 0 : i32
    %c0_i32_0 = arith.constant 0 : i32
    return %arg0, %c0_i32 : i32, i32
  }
}

</mosaic_0001>

<llo_original>
// kernel: tpu_custom_call.1
$region0: #{tpu_custom_call.1}
  #allocation0 [shape = 'u32[]', space=smem, size = 0x4, offset = 0x4, fixed_abs, tag = 'smem constant byte address 0x4 - core index']
  #allocation1 [shape = 'u32[144,128]{1,0:T(1,128)}', space=vmem, size = 0x12000, scoped, tag = 'internal scratch']
  %s0 = inlined_call_operand.vmem [shape: f32[8,32], index: 0, kind: input, shape index: {}]
  %s1 = inlined_call_operand.hbm [shape: f32[32,64], index: 1, kind: input, shape index: {}]
  %s2 = inlined_call_operand.vmem [shape: f32[1,64], index: 2, kind: input, shape index: {}]
  %s3 = inlined_call_operand.vmem [shape: f32[64,64], index: 3, kind: input, shape index: {}]
  %s4 = inlined_call_operand.hbm [shape: f32[1,64], index: 4, kind: input, shape index: {}]
  %s5 = inlined_call_operand.vmem [shape: f32[64,4], index: 5, kind: input, shape index: {}]
  %s6 = inlined_call_operand.vmem [shape: f32[1,4], index: 6, kind: input, shape index: {}]
  %s7 = inlined_call_operand.hbm [shape: bf16[8,128], index: 7, kind: output, shape index: {0}]
  %s8 = inlined_call_operand.vmem [shape: f32[8,4], index: 8, kind: output, shape index: {1}]
  %9 = xla_tuple %s7, %s8
  %s10 = sld [smem:[#allocation0]]
  $region54: #{tpu_custom_call.1} parent=0
    _
  %s12 = ssub.s32 1, %s10
  %s13 = scalar_select 0, %s12, %s10
  $region1: #{tpu_custom_call.1} parent=0
    #allocation2 [shape = 'u8[16384]{0}', space=vmem, size = 0x4000, scoped, tag = 'input window, operand 1, single buffered']
    #allocation3 [shape = 's32[1]{0}', space=sflag, size = 0x4, scoped, tag = 'scoped memory for tpu_custom_call.1']
    #allocation4 [shape = 's32[1]{0}', space=sflag, size = 0x4, scoped, tag = 'scoped memory for tpu_custom_call.1']
    #allocation5 [shape = 'u8[512]{0}', space=vmem, size = 0x400, scoped, tag = 'input window, operand 4, single buffered']
    #allocation6 [shape = 's32[1]{0}', space=sflag, size = 0x4, scoped, tag = 'scoped memory for tpu_custom_call.1']
    #allocation7 [shape = 'u8[2048]{0}', space=vmem, size = 0x800, scoped, tag = 'output window, operand 0, single buffered']
    %14 = vsyncpa [#allocation3], 0
    %15 = vsyncpa [#allocation6], 0
    %16 = vsyncpa [#allocation4], 0
    // Predicated region
    $region2: #{tpu_custom_call.1} parent=1 // pred_check
      _
    $region3: #{tpu_custom_call.1} parent=1 // pred_check_branch
      %18 = sbr.rel (0) target = $region5
    $region4: #{tpu_custom_call.1} parent=1 // pred_region
      _
    $region5: #{tpu_custom_call.1} parent=1 // pred_fallthru
      _
    // Predicated region
    $region6: #{tpu_custom_call.1} parent=1 // pred_check
      _
    $region7: #{tpu_custom_call.1} parent=1 // pred_check_branch
      %20 = sbr.rel (0) target = $region9
    $region8: #{tpu_custom_call.1} parent=1 // pred_region
      %s22 = ssub.s32 512, 512
      %23 = vsyncadd [#allocation3], %s22
      %s24 = sshll.u32 [#allocation2], 4
      %s25 = int_to_ptr.vmem [resolvable:$true] %s24
      %30 = dma.hbm_to_vmem [thread:$0]  %s1, 512, %s25, [#allocation3], 128, 128, 8
    $region9: #{tpu_custom_call.1} parent=1 // pred_fallthru
      _
    // Predicated region
    $region10: #{tpu_custom_call.1} parent=1 // pred_check
      _
    $region11: #{tpu_custom_call.1} parent=1 // pred_check_branch
      %32 = sbr.rel (0) target = $region13
    $region12: #{tpu_custom_call.1} parent=1 // pred_region
      _
    $region13: #{tpu_custom_call.1} parent=1 // pred_fallthru
      _
    // Predicated region
    $region14: #{tpu_custom_call.1} parent=1 // pred_check
      _
    $region15: #{tpu_custom_call.1} parent=1 // pred_check_branch
      %34 = sbr.rel (0) target = $region17
    $region16: #{tpu_custom_call.1} parent=1 // pred_region
      _
    $region17: #{tpu_custom_call.1} parent=1 // pred_fallthru
      _
    // Predicated region
    $region18: #{tpu_custom_call.1} parent=1 // pred_check
      _
    $region19: #{tpu_custom_call.1} parent=1 // pred_check_branch
      %36 = sbr.rel (0) target = $region21
    $region20: #{tpu_custom_call.1} parent=1 // pred_region
      %s38 = ssub.s32 16, 16
      %39 = vsyncadd [#allocation6], %s38
      %s41 = sshll.u32 [#allocation5], 4
      %s42 = int_to_ptr.vmem [resolvable:$true] %s41
      %44 = dma.hbm_to_vmem [thread:$0]  %s4, 16, %s42, [#allocation6]
    $region21: #{tpu_custom_call.1} parent=1 // pred_fallthru
      _
    // Predicated region
    $region22: #{tpu_custom_call.1} parent=1 // pred_check
      _
    $region23: #{tpu_custom_call.1} parent=1 // pred_check_branch
      %46 = sbr.rel (0) target = $region25
    $region24: #{tpu_custom_call.1} parent=1 // pred_region
      _
    $region25: #{tpu_custom_call.1} parent=1 // pred_fallthru
      _
    // Predicated region
    $region26: #{tpu_custom_call.1} parent=1 // pred_check
      _
    $region27: #{tpu_custom_call.1} parent=1 // pred_check_branch
      %48 = sbr.rel (0) target = $region29
    $region28: #{tpu_custom_call.1} parent=1 // pred_region
      _
    $region29: #{tpu_custom_call.1} parent=1 // pred_fallthru
      _
    // Predicated region
    $region30: #{tpu_custom_call.1} parent=1 // pred_check
      _
    $region31: #{tpu_custom_call.1} parent=1 // pred_check_branch
      %50 = sbr.rel (0) target = $region33
    $region32: #{tpu_custom_call.1} parent=1 // pred_region
      %51 = dma.done [#allocation3], 512
    $region33: #{tpu_custom_call.1} parent=1 // pred_fallthru
      _
    // Predicated region
    $region34: #{tpu_custom_call.1} parent=1 // pred_check
      _
    $region35: #{tpu_custom_call.1} parent=1 // pred_check_branch
      %53 = sbr.rel (0) target = $region37
    $region36: #{tpu_custom_call.1} parent=1 // pred_region
      %54 = dma.done [#allocation6], 16
    $region37: #{tpu_custom_call.1} parent=1 // pred_fallthru
      _
    %v55 = vld [vmem:[%s0] sm:$0xff]
    %v56 = vld [vmem:[#allocation2] sm:$0xff]
    %v57 = vld [vmem:[#allocation2 + $0x8] sm:$0xff]
    %v58 = vld [vmem:[#allocation2 + $0x10] sm:$0xff]
    %v59 = vld [vmem:[#allocation2 + $0x18] sm:$0xff]
    %v60 = vld [vmem:[%s2] sm:$0x1]
    %v62 = vlaneseq
    %v63 = vshrl.u32 %v62, 7
    %v64 = vsub.s32 0, %v63
    %v65 = vrot.slane %v60, %v64
    %vm67 = vcmask 261120
    %v69 = vsel %vm67, %v55, 0
    %71 = vmatprep.subr.mxu0 0.0
    %72 = vmatpush1.msra.mxu0 0.0
    %73 = vmatprep.subr.mxu0 0.0
    %74 = vmatpush1.msra.mxu0 0.0
    %75 = vmatprep.subr.mxu0 0.0
    %76 = vmatpush1.msra.mxu0 0.0
    %77 = vmatprep.subr.mxu0 0.0
    %78 = vmatpush1.msra.mxu0 0.0
    %79 = vmatprep.subr.mxu0 0.0
    %80 = vmatpush1.msra.mxu0 0.0
    %81 = vmatprep.subr.mxu0 0.0
    %82 = vmatpush1.msra.mxu0 0.0
    %83 = vmatprep.subr.mxu0 0.0
    %84 = vmatpush1.msra.mxu0 0.0
    %85 = vmatprep.subr.mxu0 0.0
    %86 = vmatpush1.msra.mxu0 0.0
    %87 = vmatprep.subr.mxu0 0.0
    %88 = vmatpush1.msra.mxu0 0.0
    %89 = vmatprep.subr.mxu0 0.0
    %90 = vmatpush1.msra.mxu0 0.0
    %91 = vmatprep.subr.mxu0 0.0
    %92 = vmatpush1.msra.mxu0 0.0
    %93 = vmatprep.subr.mxu0 0.0
    %94 = vmatpush1.msra.mxu0 0.0
    %95 = vmatprep.subr.mxu0 0.0
    %96 = vmatpush1.msra.mxu0 %v59
    %97 = vmatprep.subr.mxu0 0.0
    %98 = vmatpush1.msra.mxu0 %v58
    %99 = vmatprep.subr.mxu0 0.0
    %100 = vmatpush1.msra.mxu0 %v57
    %101 = vmatprep.subr.mxu0 0.0
    %102 = vmatpush1.msra.mxu0 %v56
    %103 = vmatprep.subr.mxu0 0.0
    %104 = vmatpush2.msra.mxu0 0.0
    %105 = vmatprep.subr.mxu0 0.0
    %106 = vmatpush2.msra.mxu0 0.0
    %107 = vmatprep.subr.mxu0 0.0
    %108 = vmatpush2.msra.mxu0 0.0
    %109 = vmatprep.subr.mxu0 0.0
    %110 = vmatpush2.msra.mxu0 0.0
    %111 = vmatprep.subr.mxu0 0.0
    %112 = vmatpush2.msra.mxu0 0.0
    %113 = vmatprep.subr.mxu0 0.0
    %114 = vmatpush2.msra.mxu0 0.0
    %115 = vmatprep.subr.mxu0 0.0
    %116 = vmatpush2.msra.mxu0 0.0
    %117 = vmatprep.subr.mxu0 0.0
    %118 = vmatpush2.msra.mxu0 0.0
    %119 = vmatprep.subr.mxu0 0.0
    %120 = vmatpush2.msra.mxu0 0.0
    %121 = vmatprep.subr.mxu0 0.0
    %122 = vmatpush2.msra.mxu0 0.0
    %123 = vmatprep.subr.mxu0 0.0
    %124 = vmatpush2.msra.mxu0 0.0
    %125 = vmatprep.subr.mxu0 0.0
    %126 = vmatpush2.msra.mxu0 0.0
    %127 = vmatprep.subr.mxu0 0.0
    %128 = vmatpush2.msra.mxu0 0.0
    %129 = vmatprep.subr.mxu0 0.0
    %130 = vmatpush2.msra.mxu0 0.0
    %131 = vmatprep.subr.mxu0 0.0
    %132 = vmatpush2.msra.mxu0 0.0
    %133 = vmatprep.subr.mxu0 0.0
    %134 = vmatpush2.msra.mxu0 0.0
    %135 = vmatprep.mubr.f32.mxu0 0.0
    %136 = vmatmul.mubr.f32.gmra.mxu0 %v69
    %v137 = vpop.f32.mrf.mxu0
    %v138 = vadd.f32 %v65, %v137
    %v139 = vpop.f32.mrf.mxu0
    %140 = vdwg.mxu0
    %v141 = vxor.u32 %v138, 2147483648
    %v142 = vmul.f32 %v141, 1.442695
    %v143 = vpow.pop %v142
    %v144 = vadd.f32 %v143, 1.0
    %v145 = vrcp.pop %v144
    %v146 = vmul.f32 1.0, %v145
    %147 = vrot.lane.b32.xlu0 %v55, 32
    %v148 = vpop.permute.xlu0 %147
    %v150 = vsel %vm67, %v55, %v148
    %v151 = vmul.f32 %v150, %v146
    %v152 = vld [vmem:[%s3] sm:$0xff]
    %v153 = vld [vmem:[%s3 + $0x8] sm:$0xff]
    %v154 = vld [vmem:[%s3 + $0x10] sm:$0xff]
    %v155 = vld [vmem:[%s3 + $0x18] sm:$0xff]
    %v156 = vld [vmem:[%s3 + $0x20] sm:$0xff]
    %v157 = vld [vmem:[%s3 + $0x28] sm:$0xff]
    %v158 = vld [vmem:[%s3 + $0x30] sm:$0xff]
    %v159 = vld [vmem:[%s3 + $0x38] sm:$0xff]
    %v160 = vld [vmem:[#allocation5] sm:$0x1]
    %v162 = vlaneseq
    %v163 = vshrl.u32 %v162, 7
    %v164 = vsub.s32 0, %v163
    %v165 = vrot.slane %v160, %v164
    %vm167 = vcmask 523264
    %v169 = vsel %vm167, %v151, 0
    %171 = vmatprep.subr.mxu0 0.0
    %172 = vmatpush1.msra.mxu0 0.0
    %173 = vmatprep.subr.mxu0 0.0
    %174 = vmatpush1.msra.mxu0 0.0
    %175 = vmatprep.subr.mxu0 0.0
    %176 = vmatpush1.msra.mxu0 0.0
    %177 = vmatprep.subr.mxu0 0.0
    %178 = vmatpush1.msra.mxu0 0.0
    %179 = vmatprep.subr.mxu0 0.0
    %180 = vmatpush1.msra.mxu0 0.0
    %181 = vmatprep.subr.mxu0 0.0
    %182 = vmatpush1.msra.mxu0 0.0
    %183 = vmatprep.subr.mxu0 0.0
    %184 = vmatpush1.msra.mxu0 0.0
    %185 = vmatprep.subr.mxu0 0.0
    %186 = vmatpush1.msra.mxu0 0.0
    %187 = vmatprep.subr.mxu0 0.0
    %188 = vmatpush1.msra.mxu0 %v159
    %189 = vmatprep.subr.mxu0 0.0
    %190 = vmatpush1.msra.mxu0 %v158
    %191 = vmatprep.subr.mxu0 0.0
    %192 = vmatpush1.msra.mxu0 %v157
    %193 = vmatprep.subr.mxu0 0.0
    %194 = vmatpush1.msra.mxu0 %v156
    %195 = vmatprep.subr.mxu0 0.0
    %196 = vmatpush1.msra.mxu0 %v155
    %197 = vmatprep.subr.mxu0 0.0
    %198 = vmatpush1.msra.mxu0 %v154
    %199 = vmatprep.subr.mxu0 0.0
    %200 = vmatpush1.msra.mxu0 %v153
    %201 = vmatprep.subr.mxu0 0.0
    %202 = vmatpush1.msra.mxu0 %v152
    %203 = vmatprep.subr.mxu0 0.0
    %204 = vmatpush2.msra.mxu0 0.0
    %205 = vmatprep.subr.mxu0 0.0
    %206 = vmatpush2.msra.mxu0 0.0
    %207 = vmatprep.subr.mxu0 0.0
    %208 = vmatpush2.msra.mxu0 0.0
    %209 = vmatprep.subr.mxu0 0.0
    %210 = vmatpush2.msra.mxu0 0.0
    %211 = vmatprep.subr.mxu0 0.0
    %212 = vmatpush2.msra.mxu0 0.0
    %213 = vmatprep.subr.mxu0 0.0
    %214 = vmatpush2.msra.mxu0 0.0
    %215 = vmatprep.subr.mxu0 0.0
    %216 = vmatpush2.msra.mxu0 0.0
    %217 = vmatprep.subr.mxu0 0.0
    %218 = vmatpush2.msra.mxu0 0.0
    %219 = vmatprep.subr.mxu0 0.0
    %220 = vmatpush2.msra.mxu0 0.0
    %221 = vmatprep.subr.mxu0 0.0
    %222 = vmatpush2.msra.mxu0 0.0
    %223 = vmatprep.subr.mxu0 0.0
    %224 = vmatpush2.msra.mxu0 0.0
    %225 = vmatprep.subr.mxu0 0.0
    %226 = vmatpush2.msra.mxu0 0.0
    %227 = vmatprep.subr.mxu0 0.0
    %228 = vmatpush2.msra.mxu0 0.0
    %229 = vmatprep.subr.mxu0 0.0
    %230 = vmatpush2.msra.mxu0 0.0
    %231 = vmatprep.subr.mxu0 0.0
    %232 = vmatpush2.msra.mxu0 0.0
    %233 = vmatprep.subr.mxu0 0.0
    %234 = vmatpush2.msra.mxu0 0.0
    %235 = vmatprep.mubr.f32.mxu0 0.0
    %236 = vmatmul.mubr.f32.gmra.mxu0 %v169
    %v237 = vpop.f32.mrf.mxu0
    %v238 = vadd.f32 %v165, %v237
    %v239 = vpop.f32.mrf.mxu0
    %240 = vdwg.mxu0
    %v241 = vmax.f32 %v238, 0.0
    %v242 = vld [vmem:[%s5] sm:$0xff]
    %v243 = vld [vmem:[%s5 + $0x8] sm:$0xff]
    %v244 = vld [vmem:[%s5 + $0x10] sm:$0xff]
    %v245 = vld [vmem:[%s5 + $0x18] sm:$0xff]
    %v246 = vld [vmem:[%s5 + $0x20] sm:$0xff]
    %v247 = vld [vmem:[%s5 + $0x28] sm:$0xff]
    %v248 = vld [vmem:[%s5 + $0x30] sm:$0xff]
    %v249 = vld [vmem:[%s5 + $0x38] sm:$0xff]
    %v250 = vld [vmem:[%s6] sm:$0x1]
    %v252 = vlaneseq
    %v253 = vshrl.u32 %v252, 7
    %v254 = vsub.s32 0, %v253
    %v255 = vrot.slane %v250, %v254
    %v258 = vsel %vm167, %v241, 0
    %260 = vmatprep.subr.mxu0 0.0
    %261 = vmatpush1.msra.mxu0 0.0
    %262 = vmatprep.subr.mxu0 0.0
    %263 = vmatpush1.msra.mxu0 0.0
    %264 = vmatprep.subr.mxu0 0.0
    %265 = vmatpush1.msra.mxu0 0.0
    %266 = vmatprep.subr.mxu0 0.0
    %267 = vmatpush1.msra.mxu0 0.0
    %268 = vmatprep.subr.mxu0 0.0
    %269 = vmatpush1.msra.mxu0 0.0
    %270 = vmatprep.subr.mxu0 0.0
    %271 = vmatpush1.msra.mxu0 0.0
    %272 = vmatprep.subr.mxu0 0.0
    %273 = vmatpush1.msra.mxu0 0.0
    %274 = vmatprep.subr.mxu0 0.0
    %275 = vmatpush1.msra.mxu0 0.0
    %276 = vmatprep.subr.mxu0 0.0
    %277 = vmatpush1.msra.mxu0 %v249
    %278 = vmatprep.subr.mxu0 0.0
    %279 = vmatpush1.msra.mxu0 %v248
    %280 = vmatprep.subr.mxu0 0.0
    %281 = vmatpush1.msra.mxu0 %v247
    %282 = vmatprep.subr.mxu0 0.0
    %283 = vmatpush1.msra.mxu0 %v246
    %284 = vmatprep.subr.mxu0 0.0
    %285 = vmatpush1.msra.mxu0 %v245
    %286 = vmatprep.subr.mxu0 0.0
    %287 = vmatpush1.msra.mxu0 %v244
    %288 = vmatprep.subr.mxu0 0.0
    %289 = vmatpush1.msra.mxu0 %v243
    %290 = vmatprep.subr.mxu0 0.0
    %291 = vmatpush1.msra.mxu0 %v242
    %292 = vmatprep.subr.mxu0 0.0
    %293 = vmatpush2.msra.mxu0 0.0
    %294 = vmatprep.subr.mxu0 0.0
    %295 = vmatpush2.msra.mxu0 0.0
    %296 = vmatprep.subr.mxu0 0.0
    %297 = vmatpush2.msra.mxu0 0.0
    %298 = vmatprep.subr.mxu0 0.0
    %299 = vmatpush2.msra.mxu0 0.0
    %300 = vmatprep.subr.mxu0 0.0
    %301 = vmatpush2.msra.mxu0 0.0
    %302 = vmatprep.subr.mxu0 0.0
    %303 = vmatpush2.msra.mxu0 0.0
    %304 = vmatprep.subr.mxu0 0.0
    %305 = vmatpush2.msra.mxu0 0.0
    %306 = vmatprep.subr.mxu0 0.0
    %307 = vmatpush2.msra.mxu0 0.0
    %308 = vmatprep.subr.mxu0 0.0
    %309 = vmatpush2.msra.mxu0 0.0
    %310 = vmatprep.subr.mxu0 0.0
    %311 = vmatpush2.msra.mxu0 0.0
    %312 = vmatprep.subr.mxu0 0.0
    %313 = vmatpush2.msra.mxu0 0.0
    %314 = vmatprep.subr.mxu0 0.0
    %315 = vmatpush2.msra.mxu0 0.0
    %316 = vmatprep.subr.mxu0 0.0
    %317 = vmatpush2.msra.mxu0 0.0
    %318 = vmatprep.subr.mxu0 0.0
    %319 = vmatpush2.msra.mxu0 0.0
    %320 = vmatprep.subr.mxu0 0.0
    %321 = vmatpush2.msra.mxu0 0.0
    %322 = vmatprep.subr.mxu0 0.0
    %323 = vmatpush2.msra.mxu0 0.0
    %324 = vmatprep.mubr.f32.mxu0 0.0
    %325 = vmatmul.mubr.f32.gmra.mxu0 %v258
    %v326 = vpop.f32.mrf.mxu0
    %v327 = vadd.f32 %v255, %v326
    %v328 = vpop.f32.mrf.mxu0
    %329 = vdwg.mxu0
    %v330 = vpack.c.bf16 %v151, %v151
    %vm331 = vcmask 519168
    %332 = vst.msk [vmem:[#allocation7] sm:$0xf] %vm331, %v330
    %v333 = vpack.c.bf16 %v146, %v146
    %v335 = vunpack.c.l.b16 %v333
    %v336 = vpack.c.b16 %v335, %v335
    %337 = vrot.lane.b32.xlu0 %v336, 64
    %v338 = vpop.permute.xlu0 %337
    %vm340 = vcmask 1043968
    %341 = vst.msk [vmem:[#allocation7] sm:$0xf] %vm340, %v338
    %v342 = vlaneseq
    %v343 = vand.u32 %v342, 127
    %vm344 = vcmp.lt.s32.totalorder %v343, 2
    %v345 = vxor.u32 %v327, 2147483648
    %v346 = vmul.f32 %v345, 1.442695
    %v347 = vpow.pop %v346
    %v348 = vadd.f32 %v347, 1.0
    %v349 = vrcp.pop %v348
    %v350 = vmul.f32 1.0, %v349
    %v351 = vsel %vm344, %v327, %v350
    %vm352 = vcmask 31744
    %353 = vst.msk [vmem:[%s8] sm:$0xff] %vm352, %v351
    // Predicated region
    $region38: #{tpu_custom_call.1} parent=1 // pred_check
      _
    $region39: #{tpu_custom_call.1} parent=1 // pred_check_branch
      %355 = sbr.rel (0) target = $region41
    $region40: #{tpu_custom_call.1} parent=1 // pred_region
      %s357 = ssub.s32 64, 64
      %358 = vsyncadd [#allocation4], %s357
      %s360 = sshll.u32 [#allocation7], 4
      %s361 = int_to_ptr.vmem [resolvable:$true] %s360
      %363 = dma.vmem_to_hbm [thread:$0]  %s361, 64, %s7, [#allocation4]
    $region41: #{tpu_custom_call.1} parent=1 // pred_fallthru
      _
    // Predicated region
    $region42: #{tpu_custom_call.1} parent=1 // pred_check
      _
    $region43: #{tpu_custom_call.1} parent=1 // pred_check_branch
      %365 = sbr.rel (0) target = $region45
    $region44: #{tpu_custom_call.1} parent=1 // pred_region
      _
    $region45: #{tpu_custom_call.1} parent=1 // pred_fallthru
      _
    // Predicated region
    $region46: #{tpu_custom_call.1} parent=1 // pred_check
      _
    $region47: #{tpu_custom_call.1} parent=1 // pred_check_branch
      %367 = sbr.rel (0) target = $region49
    $region48: #{tpu_custom_call.1} parent=1 // pred_region
      %368 = dma.done [#allocation4], 64
    $region49: #{tpu_custom_call.1} parent=1 // pred_fallthru
      _
    // Predicated region
    $region50: #{tpu_custom_call.1} parent=1 // pred_check
      _
    $region51: #{tpu_custom_call.1} parent=1 // pred_check_branch
      %370 = sbr.rel (0) target = $region53
    $region52: #{tpu_custom_call.1} parent=1 // pred_region
      _
    $region53: #{tpu_custom_call.1} parent=1 // pred_fallthru
      _
    %371 = vsyncpa [#allocation3], 1
    %372 = vsyncpa [#allocation6], 1
    %373 = vsyncpa [#allocation4], 1

</llo_original>
